<compile_context>
chip_gen: v5e
topology: v5e:2x2
jax: 0.10.0
libtpu: 0.0.40
codegen_flags: <defaults>
</compile_context>

<pallas_src>
import functools

import jax
import jax.numpy as jnp
from jax.experimental import pallas as pl
from jax.experimental.pallas import tpu as pltpu

hidden_dim1 = 128   # GCNConv hidden width
hidden_dim2 = 64    # decoder input (latent) width


# ---------------------------------------------------------------------------
# One GCN layer:  out = act( (Â @ X) @ W + b )
# Grid = (row tiles of Â, contraction tiles of Â); reduction axis last.
# X is VMEM-resident (whole padded array); the kernel slices the tk-row panel.
# ---------------------------------------------------------------------------
def gcn_layer_kernel(a_ref, x_ref, w_ref, b_ref, o_ref, acc_ref, *, apply_relu):
    k = pl.program_id(1)
    tk = a_ref.shape[1]

    # Slice the contraction panel of the resident X (bf16) — aligned start hint.
    row0 = pl.multiple_of(k * tk, tk)
    part = jnp.dot(a_ref[...], x_ref[pl.ds(row0, tk), :],
                   preferred_element_type=jnp.float32)

    @pl.when(k == 0)
    def _():
        acc_ref[...] = part          # direct assign: no zero-fill + add pass

    @pl.when(k > 0)
    def _():
        acc_ref[...] += part

    # Epilogue (weight matmul + bias + activation) only on the final k-step.
    # Kept in f32: acc (f32) @ W (f32) preserves the accumulated precision.
    @pl.when(k == pl.num_programs(1) - 1)
    def _():
        y = jnp.dot(acc_ref[...], w_ref[...],
                    preferred_element_type=jnp.float32)
        y = y + b_ref[...]
        if apply_relu:
            y = jnp.maximum(y, 0.0)
        o_ref[...] = y.astype(o_ref.dtype)


def gcn_layer(a_bf16, x_bf16, w_f32, b_f32, *, apply_relu, out_dtype, tm, tk):
    n = a_bf16.shape[0]
    f_in = x_bf16.shape[1]
    f_out = w_f32.shape[1]
    assert n % tm == 0 and n % tk == 0, (n, tm, tk)

    kernel = functools.partial(gcn_layer_kernel, apply_relu=apply_relu)
    return pl.pallas_call(
        kernel,
        out_shape=jax.ShapeDtypeStruct((n, f_out), out_dtype),
        grid_spec=pltpu.PrefetchScalarGridSpec(
            num_scalar_prefetch=0,
            grid=(n // tm, n // tk),
            in_specs=[
                pl.BlockSpec((tm, tk), lambda i, k: (i, k)),       # Â tile (bf16)
                pl.BlockSpec((n, f_in), lambda i, k: (0, 0)),      # X resident (bf16)
                pl.BlockSpec((f_in, f_out), lambda i, k: (0, 0)),  # W resident (f32)
                pl.BlockSpec((1, f_out), lambda i, k: (0, 0)),     # b resident (f32)
            ],
            out_specs=pl.BlockSpec((tm, f_out), lambda i, k: (i, 0)),
            scratch_shapes=[pltpu.VMEM((tm, f_in), jnp.float32)],  # f32 accumulator
        ),
        compiler_params=pltpu.CompilerParams(
            dimension_semantics=("parallel", "arbitrary"),
            vmem_limit_bytes=48 << 20,   # well under v7x's 64 MiB physical VMEM
        ),
    )(a_bf16, x_bf16, w_f32, b_f32)


def _pick_tiles(n_pad):
    """512-preferred, 256-aligned tiles that divide n_pad; tm leaves >=2 row
    tiles when possible so both v7x TensorCores get work."""
    def largest_divisor(cands):
        for t in cands:
            if t <= n_pad and n_pad % t == 0:
                return t
        return n_pad

    tk = largest_divisor((512, 256, 128))
    tm = tk
    for t in (512, 256, 128):
        if t <= n_pad and n_pad % t == 0 and n_pad // t >= 2:
            tm = t
            break
    return tm, tk


# ---------------------------------------------------------------------------
# AttributeDecoder forward.
# ---------------------------------------------------------------------------
def attribute_decoder(a_hat, z, w1, b1, w2, b2):
    n, _ = z.shape
    h1 = w1.shape[1]
    out_dim = w2.shape[1]

    # Pad node count so tm and tk both divide it (common unit = 128 or 256).
    pad_unit = 128 if n <= 128 else 256
    n_pad = pl.cdiv(n, pad_unit) * pad_unit
    tm, tk = _pick_tiles(n_pad)

    # Single cast + pad (no zeros + update-slice double pass over the N^2 array).
    a_p = a_hat.astype(jnp.bfloat16)
    z_p = z.astype(jnp.bfloat16)
    if n_pad != n:
        a_p = jnp.pad(a_p, ((0, n_pad - n), (0, n_pad - n)))
        z_p = jnp.pad(z_p, ((0, n_pad - n), (0, 0)))

    # Lane-dense outputs: pad output_dim up to a multiple of 128; slice back.
    out_pad = pl.cdiv(out_dim, 128) * 128
    w2_p = w2.astype(jnp.float32)
    b2_p = b2.reshape(1, -1).astype(jnp.float32)
    if out_pad != out_dim:
        w2_p = jnp.pad(w2_p, ((0, 0), (0, out_pad - out_dim)))
        b2_p = jnp.pad(b2_p, ((0, 0), (0, out_pad - out_dim)))

    # Layer 1: H = relu((Â @ Z) @ W1 + b1), bf16, 128-wide (lane-dense).
    h = gcn_layer(a_p, z_p,
                  w1.astype(jnp.float32), b1.reshape(1, -1).astype(jnp.float32),
                  apply_relu=True, out_dtype=jnp.bfloat16, tm=tm, tk=tk)

    # Layer 2: Xhat = (Â @ H) @ W2 + b2   (no activation in AttributeDecoder).
    out = gcn_layer(a_p, h, w2_p, b2_p,
                    apply_relu=False, out_dtype=jnp.float32, tm=tm, tk=tk)
    return out[:n, :out_dim]


def normalized_adjacency(edge_index, num_nodes):
    """Dense Â = D^{-1/2} (A + I) D^{-1/2}, matching PyG GCNConv defaults.

    Preprocessing in plain JAX (sparse scatter, not the hot path).
    NOTE: duplicate edges are deduplicated by .set(); keep edge_index
    duplicate-free to match PyG's gcn_norm.
    """
    src, dst = edge_index[0], edge_index[1]
    a = jnp.zeros((num_nodes, num_nodes), jnp.float32)
    a = a.at[src, dst].set(1.0)
    a = a + jnp.eye(num_nodes, dtype=jnp.float32)         # add self-loops
    deg = jnp.sum(a, axis=1)
    d_inv_sqrt = jnp.where(deg > 0, 1.0 / jnp.sqrt(deg), 0.0)
    return d_inv_sqrt[:, None] * a * d_inv_sqrt[None, :]


if __name__ == "__main__":
    key = jax.random.PRNGKey(0)
    k_z, k_w1, k_b1, k_w2, k_b2 = jax.random.split(key, 5)

    num_nodes = 256          # N (small test size)
    output_dim = 32          # reconstructed node-attribute dimension

    # Latent node embeddings (decoder input) [N, hidden_dim2].
    z = jax.random.normal(k_z, (num_nodes, hidden_dim2), jnp.float32)

    # Deterministic undirected ring graph (both edge directions, PyG-style).
    i = jnp.arange(num_nodes)
    j = (i + 1) % num_nodes
    edge_index = jnp.stack(
        [jnp.concatenate([i, j]), jnp.concatenate([j, i])], axis=0)   # [2, 2N]

    a_hat = normalized_adjacency(edge_index, num_nodes)               # [N, N]

    # Deterministic GCNConv parameters.
    w1 = jax.random.normal(k_w1, (hidden_dim2, hidden_dim1), jnp.float32) / jnp.sqrt(
        float(hidden_dim2))
    b1 = jax.random.normal(k_b1, (1, hidden_dim1), jnp.float32) * 0.1
    w2 = jax.random.normal(k_w2, (hidden_dim1, output_dim), jnp.float32) / jnp.sqrt(
        float(hidden_dim1))
    b2 = jax.random.normal(k_b2, (1, output_dim), jnp.float32) * 0.1

    out = attribute_decoder(a_hat, z, w1, b1, w2, b2)
    out = jax.block_until_ready(out)

    # Pure-f32 JAX reference of the same forward pass (PyG math order).
    h_ref = jnp.maximum(a_hat @ (z @ w1) + b1, 0.0)
    ref = a_hat @ (h_ref @ w2) + b2          # no final relu in AttributeDecoder
    assert out.shape == (num_nodes, output_dim)
    # bf16 Â / Z / H on the MXU with f32 accumulation and f32 epilogue:
    # loosened tolerance vs the pure-f32 reference.
    max_err = float(jnp.max(jnp.abs(out - ref)))
    assert jnp.allclose(out, ref, atol=1e-1, rtol=1e-1), max_err

    print("KERNEL_OK")
</pallas_src>

<mosaic_0001>
module attributes {stable_mosaic.version = 11 : i64} {
  func.func @gcn_layer_kernel(%arg0: i32, %arg1: i32, %arg2: memref<128x256xbf16, #tpu.memory_space<vmem>>, %arg3: memref<256x64xbf16, #tpu.memory_space<vmem>>, %arg4: memref<64x128xf32, #tpu.memory_space<vmem>>, %arg5: memref<1x128xf32, #tpu.memory_space<vmem>>, %arg6: memref<128x128xbf16, #tpu.memory_space<vmem>>, %arg7: memref<128x64xf32, #tpu.memory_space<vmem>>) attributes {dimension_semantics = [#tpu.dimension_semantics<parallel>, #tpu.dimension_semantics<arbitrary>], iteration_bounds = array<i64: 2, 1>, scalar_prefetch = 0 : i64, scratch_operands = 1 : i64, tpu.core_type = #tpu.core_type<tc>, window_params = [{transform_indices = @transform_0, window_bounds = array<i64: 128, 256>}, {pipeline_mode = #tpu.pipeline_mode<synchronous>, transform_indices = @transform_1, window_bounds = array<i64: 256, 64>}, {pipeline_mode = #tpu.pipeline_mode<synchronous>, transform_indices = @transform_2, window_bounds = array<i64: 64, 128>}, {pipeline_mode = #tpu.pipeline_mode<synchronous>, transform_indices = @transform_3, window_bounds = array<i64: 1, 128>}, {transform_indices = @transform_4, window_bounds = array<i64: 128, 128>}]} {
    %c256_i32 = arith.constant 256 : i32
    %0 = arith.muli %arg1, %c256_i32 : i32
    %1 = tpu.assume_multiple %0, 256 : i32
    %c0 = arith.constant 0 : index
    %c0_0 = arith.constant 0 : index
    %2 = vector.load %arg2[%c0, %c0_0] : memref<128x256xbf16, #tpu.memory_space<vmem>>, vector<128x256xbf16>
    %3 = arith.index_cast %1 : i32 to index
    %c0_1 = arith.constant 0 : index
    %4 = vector.load %arg3[%3, %c0_1] : memref<256x64xbf16, #tpu.memory_space<vmem>>, vector<256x64xbf16>
    %cst = arith.constant dense<0.000000e+00> : vector<128x64xf32>
    %5 = tpu.matmul %2, %4, %cst {dimension_numbers = #tpu.dot_dimension_numbers<[1], [0], [0], [1], [0, 0, 1, 1], [], []>} : vector<128x256xbf16>, vector<256x64xbf16>, vector<128x64xf32> -> vector<128x64xf32>
    %c0_i32 = arith.constant 0 : i32
    %6 = arith.cmpi eq, %arg1, %c0_i32 : i32
    %7 = arith.extui %6 : i1 to i32
    %c0_i32_2 = arith.constant 0 : i32
    %8 = arith.cmpi ne, %7, %c0_i32_2 : i32
    scf.if %8 {
      %c0_7 = arith.constant 0 : index
      %c0_8 = arith.constant 0 : index
      %15 = vector.load %arg7[%c0_7, %c0_8] : memref<128x64xf32, #tpu.memory_space<vmem>>, vector<128x64xf32>
      tpu.vector_store %arg7[%c0_7, %c0_8], %5 {strides = array<i32>} : memref<128x64xf32, #tpu.memory_space<vmem>>, vector<128x64xf32>,
    } else {
    }
    %c0_i32_3 = arith.constant 0 : i32
    %9 = arith.cmpi sgt, %arg1, %c0_i32_3 : i32
    %10 = arith.extui %9 : i1 to i32
    %c0_i32_4 = arith.constant 0 : i32
    %11 = arith.cmpi ne, %10, %c0_i32_4 : i32
    scf.if %11 {
      %c0_7 = arith.constant 0 : index
      %c0_8 = arith.constant 0 : index
      %15 = vector.load %arg7[%c0_7, %c0_8] : memref<128x64xf32, #tpu.memory_space<vmem>>, vector<128x64xf32>
      %16 = arith.addf %15, %5 : vector<128x64xf32>
      %c0_9 = arith.constant 0 : index
      %c0_10 = arith.constant 0 : index
      %17 = vector.load %arg7[%c0_9, %c0_10] : memref<128x64xf32, #tpu.memory_space<vmem>>, vector<128x64xf32>
      tpu.vector_store %arg7[%c0_9, %c0_10], %16 {strides = array<i32>} : memref<128x64xf32, #tpu.memory_space<vmem>>, vector<128x64xf32>,
    } else {
    }
    %c0_i32_5 = arith.constant 0 : i32
    %12 = arith.cmpi eq, %arg1, %c0_i32_5 : i32
    %13 = arith.extui %12 : i1 to i32
    %c0_i32_6 = arith.constant 0 : i32
    %14 = arith.cmpi ne, %13, %c0_i32_6 : i32
    scf.if %14 {
      %c0_7 = arith.constant 0 : index
      %c0_8 = arith.constant 0 : index
      %15 = vector.load %arg7[%c0_7, %c0_8] : memref<128x64xf32, #tpu.memory_space<vmem>>, vector<128x64xf32>
      %c0_9 = arith.constant 0 : index
      %c0_10 = arith.constant 0 : index
      %16 = vector.load %arg4[%c0_9, %c0_10] : memref<64x128xf32, #tpu.memory_space<vmem>>, vector<64x128xf32>
      %cst_11 = arith.constant dense<0.000000e+00> : vector<128x128xf32>
      %17 = tpu.matmul %15, %16, %cst_11 {dimension_numbers = #tpu.dot_dimension_numbers<[1], [0], [0], [1], [0, 0, 1, 1], [], []>} : vector<128x64xf32>, vector<64x128xf32>, vector<128x128xf32> -> vector<128x128xf32>
      %c0_12 = arith.constant 0 : index
      %c0_13 = arith.constant 0 : index
      %18 = vector.load %arg5[%c0_12, %c0_13] : memref<1x128xf32, #tpu.memory_space<vmem>>, vector<1x128xf32>
      %19 = vector.broadcast %18 : vector<1x128xf32> to vector<128x128xf32>
      %20 = arith.addf %17, %19 : vector<128x128xf32>
      %cst_14 = arith.constant 0.000000e+00 : f32
      %21 = vector.broadcast %cst_14 : f32 to vector<128x128xf32>
      %22 = arith.maximumf %20, %21 : vector<128x128xf32>
      %23 = arith.truncf %22 : vector<128x128xf32> to vector<128x128xbf16>
      %c0_15 = arith.constant 0 : index
      %c0_16 = arith.constant 0 : index
      %24 = vector.load %arg6[%c0_15, %c0_16] : memref<128x128xbf16, #tpu.memory_space<vmem>>, vector<128x128xbf16>
      tpu.vector_store %arg6[%c0_15, %c0_16], %23 {strides = array<i32>} : memref<128x128xbf16, #tpu.memory_space<vmem>>, vector<128x128xbf16>,
    } else {
    }
    return
  }
  func.func @transform_0(%arg0: i32, %arg1: i32) -> (i32, i32) {
    %c0_i32 = arith.constant 0 : i32
    return %arg0, %arg1 : i32, i32
  }
  func.func @transform_1(%arg0: i32, %arg1: i32) -> (i32, i32) {
    %c0_i32 = arith.constant 0 : i32
    %c0_i32_0 = arith.constant 0 : i32
    %c0_i32_1 = arith.constant 0 : i32
    return %c0_i32, %c0_i32_0 : i32, i32
  }
  func.func @transform_2(%arg0: i32, %arg1: i32) -> (i32, i32) {
    %c0_i32 = arith.constant 0 : i32
    %c0_i32_0 = arith.constant 0 : i32
    %c0_i32_1 = arith.constant 0 : i32
    return %c0_i32, %c0_i32_0 : i32, i32
  }
  func.func @transform_3(%arg0: i32, %arg1: i32) -> (i32, i32) {
    %c0_i32 = arith.constant 0 : i32
    %c0_i32_0 = arith.constant 0 : i32
    %c0_i32_1 = arith.constant 0 : i32
    return %c0_i32, %c0_i32_0 : i32, i32
  }
  func.func @transform_4(%arg0: i32, %arg1: i32) -> (i32, i32) {
    %c0_i32 = arith.constant 0 : i32
    %c0_i32_0 = arith.constant 0 : i32
    return %arg0, %c0_i32 : i32, i32
  }
}

</mosaic_0001>

<llo_original>
// kernel: tpu_custom_call.1
$region0: #{tpu_custom_call.1}
  #allocation0 [shape = 'u32[]', space=smem, size = 0x4, offset = 0x4, fixed_abs, tag = 'smem constant byte address 0x4 - core index']
  #allocation1 [shape = 'u32[72,128]{1,0:T(1,128)}', space=vmem, size = 0x9000, scoped, tag = 'internal scratch']
  #allocation2 [shape = 'f32[128,64]{1,0:T(8,128)}', space=vmem, size = 0x10000, scoped, tag = 'scratch operand']
  %s0 = inlined_call_operand.hbm [shape: bf16[256,256], index: 0, kind: input, shape index: {}]
  %s1 = inlined_call_operand.vmem [shape: bf16[256,64], index: 1, kind: input, shape index: {}]
  %s2 = inlined_call_operand.vmem [shape: f32[64,128], index: 2, kind: input, shape index: {}]
  %s3 = inlined_call_operand.vmem [shape: f32[1,128], index: 3, kind: input, shape index: {}]
  %s4 = inlined_call_operand.hbm [shape: bf16[256,128], index: 4, kind: output, shape index: {}]
  %s5 = sld [smem:[#allocation0]]
  $region65: #{tpu_custom_call.1} parent=0
    _
  %s7 = ssub.s32 1, %s5
  %s8 = scalar_select 0, %s7, %s5
  $region1: #{tpu_custom_call.1} parent=0
    #allocation3 [shape = 'u8[131072]{0}', space=vmem, size = 0x20000, scoped, tag = 'input window, operand 0']
    #allocation4 [shape = 's32[2]{0}', space=sflag, size = 0x8, scoped, tag = 'scoped memory for tpu_custom_call.1']
    #allocation5 [shape = 's32[2]{0}', space=sflag, size = 0x8, scoped, tag = 'scoped memory for tpu_custom_call.1']
    #allocation6 [shape = 'u8[65536]{0}', space=vmem, size = 0x10000, scoped, tag = 'output window, operand 0']
    %9 = vsyncpa [#allocation4], 0
    %s10 = scalar_lea.sflag [#allocation4], 1
    %11 = vsyncpa %s10, 0
    %12 = vsyncpa [#allocation5], 0
    %s13 = scalar_lea.sflag [#allocation5], 1
    %14 = vsyncpa %s13, 0
    loop: start=0, step=1, limit=4
    $region2: #{tpu_custom_call.1} parent=1 // loop_pre_header
      _
    $region3: #{tpu_custom_call.1} parent=1 // loop_header
      %s16 = sphi 0, %s20
      %p17 = scmp.ge.s32.totalorder %s16, 4
      %s23 = sphi 0, %s35
      %s24 = sphi 0, %s31
      %s25 = sphi 0, %s23
      %s26 = sphi 0, %s24
      %s27 = sphi 0, %s25
      %s28 = sphi 0, %s26
      %s40 = sphi 0, %s42
      %s43 = sphi 0, %s40
      %s44 = sphi 0, %s43
      %s60 = sphi 0, %s44
      %s64 = sphi 0, %s64
      %s66 = sphi 0, %s64
      %s67 = sphi 0, %s66
      %s81 = sphi 0, %s67
      %s85 = sphi 0, %s85
      %s87 = sphi 0, %s85
      %s88 = sphi 0, %s87
      %s102 = sphi 0, %s88
      %s106 = sphi 0, %s106
      %s108 = sphi 0, %s106
      %s109 = sphi 0, %s108
      %s123 = sphi 0, %s109
      %s129 = sphi 0, %s131
      %s132 = sphi 0, %s129
      %s133 = sphi 0, %s132
      %s149 = sphi 0, %s133
    $region4: #{tpu_custom_call.1} parent=1 // loop_header_branch
      %19 = sbr.rel (%p17) target = $region8
    $region5: #{tpu_custom_call.1} parent=1 // loop_body
      %s21 = ssub.s32 %s16, 1
      %s22 = ssub.s32 %s16, 2
      %s29 = sadd.s32 1, %s24
      %p30 = scmp.ge.s32.totalorder %s29, 1
      %s31 = scalar_select %p30, 0, %s29
      %s32 = sadd.s32 1, %s23
      %s33 = scalar_select %p30, %s32, %s23
      %p34 = scmp.ge.s32.totalorder %s33, 2
      %s35 = scalar_select %p34, 0, %s33
      %s36 = ssub.s32 %s23, %s35
      %s37 = ssub.s32 %s24, %s31
      %s38 = sor.u32 %s36, %s37
      %p39 = scmp.eq.s32.totalorder %s38, 0
      %s41 = sadd.s32 %s40, 1
      %s42 = scalar_select %p39, %s40, %s41
      %p45 = pneg %p39
      %p46 = scmp.eq.s32.totalorder %s16, 1
      %p47 = por %p45, %p46
      %p48 = scmp.ne.s32.totalorder %s40, %s43
      %p49 = scmp.eq.s32.totalorder %s16, 0
      %p50 = por %p48, %p49
      %p51 = scmp.ne.s32.totalorder %s40, %s43
      %p52 = scmp.eq.s32.totalorder %s21, 1
      %p53 = por %p51, %p52
      %p54 = scmp.ne.s32.totalorder %s43, %s44
      %p55 = scmp.eq.s32.totalorder %s21, 0
      %p56 = por %p54, %p55
      %p57 = scmp.ne.s32.totalorder %s43, %s44
      %p58 = scmp.eq.s32.totalorder %s22, 1
      %p59 = por %p57, %p58
      %p61 = scmp.ne.s32.totalorder %s44, %s60
      %p62 = scmp.eq.s32.totalorder %s22, 0
      %p63 = por %p61, %p62
      %s65 = sadd.s32 %s64, 1
      %p68 = scmp.eq.s32.totalorder %s16, 1
      %p69 = scmp.ne.s32.totalorder %s64, %s66
      %p70 = scmp.eq.s32.totalorder %s16, 0
      %p71 = por %p69, %p70
      %p72 = scmp.ne.s32.totalorder %s64, %s66
      %p73 = scmp.eq.s32.totalorder %s21, 1
      %p74 = por %p72, %p73
      %p75 = scmp.ne.s32.totalorder %s66, %s67
      %p76 = scmp.eq.s32.totalorder %s21, 0
      %p77 = por %p75, %p76
      %p78 = scmp.ne.s32.totalorder %s66, %s67
      %p79 = scmp.eq.s32.totalorder %s22, 1
      %p80 = por %p78, %p79
      %p82 = scmp.ne.s32.totalorder %s67, %s81
      %p83 = scmp.eq.s32.totalorder %s22, 0
      %p84 = por %p82, %p83
      %s86 = sadd.s32 %s85, 1
      %p89 = scmp.eq.s32.totalorder %s16, 1
      %p90 = scmp.ne.s32.totalorder %s85, %s87
      %p91 = scmp.eq.s32.totalorder %s16, 0
      %p92 = por %p90, %p91
      %p93 = scmp.ne.s32.totalorder %s85, %s87
      %p94 = scmp.eq.s32.totalorder %s21, 1
      %p95 = por %p93, %p94
      %p96 = scmp.ne.s32.totalorder %s87, %s88
      %p97 = scmp.eq.s32.totalorder %s21, 0
      %p98 = por %p96, %p97
      %p99 = scmp.ne.s32.totalorder %s87, %s88
      %p100 = scmp.eq.s32.totalorder %s22, 1
      %p101 = por %p99, %p100
      %p103 = scmp.ne.s32.totalorder %s88, %s102
      %p104 = scmp.eq.s32.totalorder %s22, 0
      %p105 = por %p103, %p104
      %s107 = sadd.s32 %s106, 1
      %p110 = scmp.eq.s32.totalorder %s16, 1
      %p111 = scmp.ne.s32.totalorder %s106, %s108
      %p112 = scmp.eq.s32.totalorder %s16, 0
      %p113 = por %p111, %p112
      %p114 = scmp.ne.s32.totalorder %s106, %s108
      %p115 = scmp.eq.s32.totalorder %s21, 1
      %p116 = por %p114, %p115
      %p117 = scmp.ne.s32.totalorder %s108, %s109
      %p118 = scmp.eq.s32.totalorder %s21, 0
      %p119 = por %p117, %p118
      %p120 = scmp.ne.s32.totalorder %s108, %s109
      %p121 = scmp.eq.s32.totalorder %s22, 1
      %p122 = por %p120, %p121
      %p124 = scmp.ne.s32.totalorder %s109, %s123
      %p125 = scmp.eq.s32.totalorder %s22, 0
      %p126 = por %p124, %p125
      %s127 = ssub.s32 %s23, %s35
      %p128 = scmp.eq.s32.totalorder %s127, 0
      %s130 = sadd.s32 %s129, 1
      %s131 = scalar_select %p128, %s129, %s130
      %p134 = pneg %p128
      %p135 = scmp.eq.s32.totalorder %s16, 1
      %p136 = por %p134, %p135
      %p137 = scmp.ne.s32.totalorder %s129, %s132
      %p138 = scmp.eq.s32.totalorder %s16, 0
      %p139 = por %p137, %p138
      %p140 = scmp.ne.s32.totalorder %s129, %s132
      %p141 = scmp.eq.s32.totalorder %s21, 1
      %p142 = por %p140, %p141
      %p143 = scmp.ne.s32.totalorder %s132, %s133
      %p144 = scmp.eq.s32.totalorder %s21, 0
      %p145 = por %p143, %p144
      %p146 = scmp.ne.s32.totalorder %s132, %s133
      %p147 = scmp.eq.s32.totalorder %s22, 1
      %p148 = por %p146, %p147
      %p150 = scmp.ne.s32.totalorder %s133, %s149
      %p151 = scmp.eq.s32.totalorder %s22, 0
      %p152 = por %p150, %p151
      %p153 = scmp.le.s32.totalorder 1, %s16
      %p154 = scmp.lt.s32.totalorder %s16, 3
      %p155 = pnand %p153, %p154
      %p156 = pneg %p155
      // Predicated region
      $region9: #{tpu_custom_call.1} parent=5 // pred_check
        _
      $region10: #{tpu_custom_call.1} parent=5 // pred_check_branch
        %158 = sbr.rel (%p155) target = $region12
      $region11: #{tpu_custom_call.1} parent=5 // pred_region
        %s159 = ssub.s32 %s16, 1
        // Predicated region
        $region13: #{tpu_custom_call.1} parent=11 // pred_check
          %p160 = pneg %p77
        $region14: #{tpu_custom_call.1} parent=11 // pred_check_branch
          %162 = sbr.rel (%p160) target = $region16
        $region15: #{tpu_custom_call.1} parent=11 // pred_region
          _
        $region16: #{tpu_custom_call.1} parent=11 // pred_fallthru
          _
        // Predicated region
        $region17: #{tpu_custom_call.1} parent=11 // pred_check
          %p163 = pneg %p98
        $region18: #{tpu_custom_call.1} parent=11 // pred_check_branch
          %165 = sbr.rel (%p163) target = $region20
        $region19: #{tpu_custom_call.1} parent=11 // pred_region
          _
        $region20: #{tpu_custom_call.1} parent=11 // pred_fallthru
          _
        // Predicated region
        $region21: #{tpu_custom_call.1} parent=11 // pred_check
          %p166 = pneg %p119
        $region22: #{tpu_custom_call.1} parent=11 // pred_check_branch
          %168 = sbr.rel (%p166) target = $region24
        $region23: #{tpu_custom_call.1} parent=11 // pred_region
          _
        $region24: #{tpu_custom_call.1} parent=11 // pred_fallthru
          _
      $region12: #{tpu_custom_call.1} parent=5 // pred_fallthru
        _
      %p169 = scmp.lt.s32.totalorder %s16, 2
      // Predicated region
      $region25: #{tpu_custom_call.1} parent=5 // pred_check
        %p170 = pneg %p169
      $region26: #{tpu_custom_call.1} parent=5 // pred_check_branch
        %172 = sbr.rel (%p170) target = $region28
      $region27: #{tpu_custom_call.1} parent=5 // pred_region
        // Predicated region
        $region29: #{tpu_custom_call.1} parent=27 // pred_check
          %p173 = pneg %p50
        $region30: #{tpu_custom_call.1} parent=27 // pred_check_branch
          %175 = sbr.rel (%p173) target = $region32
        $region31: #{tpu_custom_call.1} parent=27 // pred_region
          %s176 = sand.u32 %s40, 1
          %s177 = scalar_lea.sflag [#allocation4], %s176
          %s178 = sand.u32 %s40, 1
          %s179 = smul.addr %s178, 128
          %s180 = scalar_lea.vmem [#allocation3], %s179
          %s181 = smul.u32 16, %s23
          %s182 = smul.u32 2, %s24
          %184 = vsyncadd %s177, 0
          %s185 = smul.addr %s181, 2
          %s186 = sadd.s32 %s182, %s185
          %s187 = smul.addr %s186, 4
          %s188 = scalar_lea.hbm %s0, %s187
          %s189 = sshll.u32 %s188, 4
          %s190 = int_to_ptr.hbm [resolvable:$true] %s189
          %s191 = sshll.u32 %s180, 4
          %s192 = int_to_ptr.vmem [resolvable:$true] %s191
          %197 = dma.hbm_to_vmem [thread:$0]  %s190, 2048, %s192, %s177, 128, 128, 8
        $region32: #{tpu_custom_call.1} parent=27 // pred_fallthru
          _
      $region28: #{tpu_custom_call.1} parent=5 // pred_fallthru
        _
      %p198 = scmp.le.s32.totalorder 1, %s16
      %p199 = scmp.lt.s32.totalorder %s16, 3
      %p200 = pnand %p198, %p199
      %p201 = pneg %p200
      // Predicated region
      $region33: #{tpu_custom_call.1} parent=5 // pred_check
        _
      $region34: #{tpu_custom_call.1} parent=5 // pred_check_branch
        %203 = sbr.rel (%p200) target = $region36
      $region35: #{tpu_custom_call.1} parent=5 // pred_region
        %s204 = ssub.s32 %s16, 1
        %s205 = sand.u32 %s43, 1
        %s206 = scalar_lea.sflag [#allocation4], %s205
        %s207 = sand.u32 %s43, 1
        %s208 = smul.addr %s207, 128
        %s209 = scalar_lea.vmem [#allocation3], %s208
        // Predicated region
        $region37: #{tpu_custom_call.1} parent=35 // pred_check
          %p210 = pneg %p56
        $region38: #{tpu_custom_call.1} parent=35 // pred_check_branch
          %212 = sbr.rel (%p210) target = $region40
        $region39: #{tpu_custom_call.1} parent=35 // pred_region
          %214 = dma.done %s206, 2048
        $region40: #{tpu_custom_call.1} parent=35 // pred_fallthru
          _
        %s215 = sand.u32 %s43, 1
        %s216 = scalar_lea.sflag [#allocation4], %s215
        %s217 = sand.u32 %s43, 1
        %s218 = smul.addr %s217, 128
        %s219 = scalar_lea.vmem [#allocation3], %s218
        %p220 = pneg %p56
        %p221 = pneg %p53
        %p222 = pneg %p77
        %p223 = pneg %p74
        %p224 = pneg %p98
        %p225 = pneg %p95
        %p226 = pneg %p119
        %p227 = pneg %p116
        %p228 = pneg %p145
        %p229 = pneg %p142
        %s230 = sand.u32 %s132, 1
        %s231 = scalar_lea.sflag [#allocation5], %s230
        %s232 = sand.u32 %s132, 1
        %s233 = smul.addr %s232, 64
        %s234 = scalar_lea.vmem [#allocation6], %s233
        %s235 = smul.u32 16, %s25
        %s236 = smul.u32 2, %s26
        %s237 = smul.u32 16, %s25
        %s238 = smul.u32 %s26, 256
        %v239 = vld [vmem:[%s209] sm:$0xff]
        %v240 = vld [vmem:[%s209 + $0x8] sm:$0xff]
        %v241 = vld [vmem:[%s209 + $0x10] sm:$0xff]
        %v242 = vld [vmem:[%s209 + $0x18] sm:$0xff]
        %v243 = vld [vmem:[%s209 + $0x20] sm:$0xff]
        %v244 = vld [vmem:[%s209 + $0x28] sm:$0xff]
        %v245 = vld [vmem:[%s209 + $0x30] sm:$0xff]
        %v246 = vld [vmem:[%s209 + $0x38] sm:$0xff]
        %v247 = vld [vmem:[%s209 + $0x40] sm:$0xff]
        %v248 = vld [vmem:[%s209 + $0x48] sm:$0xff]
        %v249 = vld [vmem:[%s209 + $0x50] sm:$0xff]
        %v250 = vld [vmem:[%s209 + $0x58] sm:$0xff]
        %v251 = vld [vmem:[%s209 + $0x60] sm:$0xff]
        %v252 = vld [vmem:[%s209 + $0x68] sm:$0xff]
        %v253 = vld [vmem:[%s209 + $0x70] sm:$0xff]
        %v254 = vld [vmem:[%s209 + $0x78] sm:$0xff]
        %s255 = sshra.s32 %s238, 3
        %s256 = sand.u32 %s238, 7
        %s257 = smul.addr %s255, 4
        %s258 = scalar_lea.vmem %s1, %s257
        %v259 = vld [vmem:[%s258] sm:$0xf]
        %v260 = vld [vmem:[%s258 + $0x4] sm:$0xf]
        %v261 = vld [vmem:[%s258 + $0x8] sm:$0xf]
        %v262 = vld [vmem:[%s258 + $0xc] sm:$0xf]
        %v263 = vld [vmem:[%s258 + $0x10] sm:$0xf]
        %v264 = vld [vmem:[%s258 + $0x14] sm:$0xf]
        %v265 = vld [vmem:[%s258 + $0x18] sm:$0xf]
        %v266 = vld [vmem:[%s258 + $0x1c] sm:$0xf]
        %v267 = vld [vmem:[%s258 + $0x20] sm:$0xf]
        %v268 = vld [vmem:[%s258 + $0x24] sm:$0xf]
        %v269 = vld [vmem:[%s258 + $0x28] sm:$0xf]
        %v270 = vld [vmem:[%s258 + $0x2c] sm:$0xf]
        %v271 = vld [vmem:[%s258 + $0x30] sm:$0xf]
        %v272 = vld [vmem:[%s258 + $0x34] sm:$0xf]
        %v273 = vld [vmem:[%s258 + $0x38] sm:$0xf]
        %v274 = vld [vmem:[%s258 + $0x3c] sm:$0xf]
        %v275 = vld [vmem:[%s258 + $0x40] sm:$0xf]
        %v276 = vld [vmem:[%s258 + $0x44] sm:$0xf]
        %v277 = vld [vmem:[%s258 + $0x48] sm:$0xf]
        %v278 = vld [vmem:[%s258 + $0x4c] sm:$0xf]
        %v279 = vld [vmem:[%s258 + $0x50] sm:$0xf]
        %v280 = vld [vmem:[%s258 + $0x54] sm:$0xf]
        %v281 = vld [vmem:[%s258 + $0x58] sm:$0xf]
        %v282 = vld [vmem:[%s258 + $0x5c] sm:$0xf]
        %v283 = vld [vmem:[%s258 + $0x60] sm:$0xf]
        %v284 = vld [vmem:[%s258 + $0x64] sm:$0xf]
        %v285 = vld [vmem:[%s258 + $0x68] sm:$0xf]
        %v286 = vld [vmem:[%s258 + $0x6c] sm:$0xf]
        %v287 = vld [vmem:[%s258 + $0x70] sm:$0xf]
        %v288 = vld [vmem:[%s258 + $0x74] sm:$0xf]
        %v289 = vld [vmem:[%s258 + $0x78] sm:$0xf]
        %v290 = vld [vmem:[%s258 + $0x7c] sm:$0xf]
        %v307 = vunpack.c.l.b16 %v239
        %v308 = vunpack.c.h.b16 %v239
        %v309 = vunpack.c.l.b16 %v240
        %v310 = vunpack.c.h.b16 %v240
        %v311 = vunpack.c.l.b16 %v241
        %v312 = vunpack.c.h.b16 %v241
        %v313 = vunpack.c.l.b16 %v242
        %v314 = vunpack.c.h.b16 %v242
        %v315 = vunpack.c.l.b16 %v243
        %v316 = vunpack.c.h.b16 %v243
        %v317 = vunpack.c.l.b16 %v244
        %v318 = vunpack.c.h.b16 %v244
        %v319 = vunpack.c.l.b16 %v245
        %v320 = vunpack.c.h.b16 %v245
        %v321 = vunpack.c.l.b16 %v246
        %v322 = vunpack.c.h.b16 %v246
        %v323 = vunpack.c.l.b16 %v247
        %v324 = vunpack.c.h.b16 %v247
        %v325 = vunpack.c.l.b16 %v248
        %v326 = vunpack.c.h.b16 %v248
        %v327 = vunpack.c.l.b16 %v249
        %v328 = vunpack.c.h.b16 %v249
        %v329 = vunpack.c.l.b16 %v250
        %v330 = vunpack.c.h.b16 %v250
        %v331 = vunpack.c.l.b16 %v251
        %v332 = vunpack.c.h.b16 %v251
        %v333 = vunpack.c.l.b16 %v252
        %v334 = vunpack.c.h.b16 %v252
        %v335 = vunpack.c.l.b16 %v253
        %v336 = vunpack.c.h.b16 %v253
        %v337 = vunpack.c.l.b16 %v254
        %v338 = vunpack.c.h.b16 %v254
        %v339 = vpack.c.b16 %v309, %v307
        %v340 = vpack.c.b16 %v310, %v308
        %v341 = vpack.c.b16 %v313, %v311
        %v342 = vpack.c.b16 %v314, %v312
        %v343 = vpack.c.b16 %v317, %v315
        %v344 = vpack.c.b16 %v318, %v316
        %v345 = vpack.c.b16 %v321, %v319
        %v346 = vpack.c.b16 %v322, %v320
        %v347 = vpack.c.b16 %v325, %v323
        %v348 = vpack.c.b16 %v326, %v324
        %v349 = vpack.c.b16 %v329, %v327
        %v350 = vpack.c.b16 %v330, %v328
        %v351 = vpack.c.b16 %v333, %v331
        %v352 = vpack.c.b16 %v334, %v332
        %v353 = vpack.c.b16 %v337, %v335
        %v354 = vpack.c.b16 %v338, %v336
        %v403 = vunpack.c.l.b16 %v259
        %v404 = vunpack.c.l.b16 %v260
        %v405 = vunpack.c.l.b16 %v261
        %v406 = vunpack.c.l.b16 %v262
        %v407 = vunpack.c.l.b16 %v263
        %v408 = vunpack.c.l.b16 %v264
        %v409 = vunpack.c.l.b16 %v265
        %v410 = vunpack.c.l.b16 %v266
        %v411 = vunpack.c.l.b16 %v267
        %v412 = vunpack.c.l.b16 %v268
        %v413 = vunpack.c.l.b16 %v269
        %v414 = vunpack.c.l.b16 %v270
        %v415 = vunpack.c.l.b16 %v271
        %v416 = vunpack.c.l.b16 %v272
        %v417 = vunpack.c.l.b16 %v273
        %v418 = vunpack.c.l.b16 %v274
        %v419 = vunpack.c.l.b16 %v275
        %v420 = vunpack.c.l.b16 %v276
        %v421 = vunpack.c.l.b16 %v277
        %v422 = vunpack.c.l.b16 %v278
        %v423 = vunpack.c.l.b16 %v279
        %v424 = vunpack.c.l.b16 %v280
        %v425 = vunpack.c.l.b16 %v281
        %v426 = vunpack.c.l.b16 %v282
        %v427 = vunpack.c.l.b16 %v283
        %v428 = vunpack.c.l.b16 %v284
        %v429 = vunpack.c.l.b16 %v285
        %v430 = vunpack.c.l.b16 %v286
        %v431 = vunpack.c.l.b16 %v287
        %v432 = vunpack.c.l.b16 %v288
        %v433 = vunpack.c.l.b16 %v289
        %v434 = vunpack.c.l.b16 %v290
        %v435 = vpack.c.b16 %v404, %v403
        %v436 = vpack.c.b16 %v406, %v405
        %v437 = vpack.c.b16 %v408, %v407
        %v438 = vpack.c.b16 %v410, %v409
        %v439 = vpack.c.b16 %v412, %v411
        %v440 = vpack.c.b16 %v414, %v413
        %v441 = vpack.c.b16 %v416, %v415
        %v442 = vpack.c.b16 %v418, %v417
        %v443 = vpack.c.b16 %v420, %v419
        %v444 = vpack.c.b16 %v422, %v421
        %v445 = vpack.c.b16 %v424, %v423
        %v446 = vpack.c.b16 %v426, %v425
        %v447 = vpack.c.b16 %v428, %v427
        %v448 = vpack.c.b16 %v430, %v429
        %v449 = vpack.c.b16 %v432, %v431
        %v450 = vpack.c.b16 %v434, %v433
        %467 = vmatpush.bf16.msra.mxu0 %v442
        %468 = vmatpush.bf16.msra.mxu0 %v441
        %469 = vmatpush.bf16.msra.mxu0 %v440
        %470 = vmatpush.bf16.msra.mxu0 %v439
        %471 = vmatpush.bf16.msra.mxu0 %v438
        %472 = vmatpush.bf16.msra.mxu0 %v437
        %473 = vmatpush.bf16.msra.mxu0 %v436
        %474 = vmatpush.bf16.msra.mxu0 %v435
        %475 = vmatmul.bf16.gmra.mxu0 %v339
        %v476 = vpop.f32.mrf.mxu0
        %v477 = vadd.f32 0.0, %v476
        %v478 = vpop.f32.mrf.mxu0
        %v479 = vadd.f32 0.0, %v478
        %480 = vmatmul.bf16.gmra.mxu0 %v341
        %v481 = vpop.f32.mrf.mxu0
        %v482 = vadd.f32 0.0, %v481
        %v483 = vpop.f32.mrf.mxu0
        %v484 = vadd.f32 0.0, %v483
        %485 = vmatmul.bf16.gmra.mxu0 %v343
        %v486 = vpop.f32.mrf.mxu0
        %v487 = vadd.f32 0.0, %v486
        %v488 = vpop.f32.mrf.mxu0
        %v489 = vadd.f32 0.0, %v488
        %490 = vmatmul.bf16.gmra.mxu0 %v345
        %v491 = vpop.f32.mrf.mxu0
        %v492 = vadd.f32 0.0, %v491
        %v493 = vpop.f32.mrf.mxu0
        %v494 = vadd.f32 0.0, %v493
        %495 = vmatmul.bf16.gmra.mxu0 %v347
        %v496 = vpop.f32.mrf.mxu0
        %v497 = vadd.f32 0.0, %v496
        %v498 = vpop.f32.mrf.mxu0
        %v499 = vadd.f32 0.0, %v498
        %500 = vmatmul.bf16.gmra.mxu0 %v349
        %v501 = vpop.f32.mrf.mxu0
        %v502 = vadd.f32 0.0, %v501
        %v503 = vpop.f32.mrf.mxu0
        %v504 = vadd.f32 0.0, %v503
        %505 = vmatmul.bf16.gmra.mxu0 %v351
        %v506 = vpop.f32.mrf.mxu0
        %v507 = vadd.f32 0.0, %v506
        %v508 = vpop.f32.mrf.mxu0
        %v509 = vadd.f32 0.0, %v508
        %510 = vmatmul.bf16.gmra.mxu0 %v353
        %v511 = vpop.f32.mrf.mxu0
        %v512 = vadd.f32 0.0, %v511
        %v513 = vpop.f32.mrf.mxu0
        %v514 = vadd.f32 0.0, %v513
        %515 = vdwg.mxu0
        %516 = vmatpush.bf16.msra.mxu0 %v450
        %517 = vmatpush.bf16.msra.mxu0 %v449
        %518 = vmatpush.bf16.msra.mxu0 %v448
        %519 = vmatpush.bf16.msra.mxu0 %v447
        %520 = vmatpush.bf16.msra.mxu0 %v446
        %521 = vmatpush.bf16.msra.mxu0 %v445
        %522 = vmatpush.bf16.msra.mxu0 %v444
        %523 = vmatpush.bf16.msra.mxu0 %v443
        %524 = vmatmul.bf16.gmra.mxu0 %v340
        %v525 = vpop.f32.mrf.mxu0
        %v526 = vadd.f32 %v477, %v525
        %v527 = vpop.f32.mrf.mxu0
        %v528 = vadd.f32 %v479, %v527
        %529 = vmatmul.bf16.gmra.mxu0 %v342
        %v530 = vpop.f32.mrf.mxu0
        %v531 = vadd.f32 %v482, %v530
        %v532 = vpop.f32.mrf.mxu0
        %v533 = vadd.f32 %v484, %v532
        %534 = vmatmul.bf16.gmra.mxu0 %v344
        %v535 = vpop.f32.mrf.mxu0
        %v536 = vadd.f32 %v487, %v535
        %v537 = vpop.f32.mrf.mxu0
        %v538 = vadd.f32 %v489, %v537
        %539 = vmatmul.bf16.gmra.mxu0 %v346
        %v540 = vpop.f32.mrf.mxu0
        %v541 = vadd.f32 %v492, %v540
        %v542 = vpop.f32.mrf.mxu0
        %v543 = vadd.f32 %v494, %v542
        %544 = vmatmul.bf16.gmra.mxu0 %v348
        %v545 = vpop.f32.mrf.mxu0
        %v546 = vadd.f32 %v497, %v545
        %v547 = vpop.f32.mrf.mxu0
        %v548 = vadd.f32 %v499, %v547
        %549 = vmatmul.bf16.gmra.mxu0 %v350
        %v550 = vpop.f32.mrf.mxu0
        %v551 = vadd.f32 %v502, %v550
        %v552 = vpop.f32.mrf.mxu0
        %v553 = vadd.f32 %v504, %v552
        %554 = vmatmul.bf16.gmra.mxu0 %v352
        %v555 = vpop.f32.mrf.mxu0
        %v556 = vadd.f32 %v507, %v555
        %v557 = vpop.f32.mrf.mxu0
        %v558 = vadd.f32 %v509, %v557
        %559 = vmatmul.bf16.gmra.mxu0 %v354
        %v560 = vpop.f32.mrf.mxu0
        %v561 = vadd.f32 %v512, %v560
        %v562 = vpop.f32.mrf.mxu0
        %v563 = vadd.f32 %v514, %v562
        %564 = vdwg.mxu0
        %p565 = scmp.eq.s32.totalorder %s26, 0
        // Predicated region
        $region41: #{tpu_custom_call.1} parent=35 // pred_check
          %p566 = pneg %p565
        $region42: #{tpu_custom_call.1} parent=35 // pred_check_branch
          %568 = sbr.rel (%p566) target = $region44
        $region43: #{tpu_custom_call.1} parent=35 // pred_region
          %vm569 = vcmask 523264
          %570 = vst.msk [vmem:[#allocation2] sm:$0xff] %vm569, %v526
          %571 = vst.msk [vmem:[#allocation2 + $0x8] sm:$0xff] %vm569, %v528
          %572 = vst.msk [vmem:[#allocation2 + $0x10] sm:$0xff] %vm569, %v531
          %573 = vst.msk [vmem:[#allocation2 + $0x18] sm:$0xff] %vm569, %v533
          %574 = vst.msk [vmem:[#allocation2 + $0x20] sm:$0xff] %vm569, %v536
          %575 = vst.msk [vmem:[#allocation2 + $0x28] sm:$0xff] %vm569, %v538
          %576 = vst.msk [vmem:[#allocation2 + $0x30] sm:$0xff] %vm569, %v541
          %577 = vst.msk [vmem:[#allocation2 + $0x38] sm:$0xff] %vm569, %v543
          %578 = vst.msk [vmem:[#allocation2 + $0x40] sm:$0xff] %vm569, %v546
          %579 = vst.msk [vmem:[#allocation2 + $0x48] sm:$0xff] %vm569, %v548
          %580 = vst.msk [vmem:[#allocation2 + $0x50] sm:$0xff] %vm569, %v551
          %581 = vst.msk [vmem:[#allocation2 + $0x58] sm:$0xff] %vm569, %v553
          %582 = vst.msk [vmem:[#allocation2 + $0x60] sm:$0xff] %vm569, %v556
          %583 = vst.msk [vmem:[#allocation2 + $0x68] sm:$0xff] %vm569, %v558
          %584 = vst.msk [vmem:[#allocation2 + $0x70] sm:$0xff] %vm569, %v561
          %585 = vst.msk [vmem:[#allocation2 + $0x78] sm:$0xff] %vm569, %v563
        $region44: #{tpu_custom_call.1} parent=35 // pred_fallthru
          _
        %p586 = scmp.gt.s32.totalorder %s26, 0
        // Predicated region
        $region45: #{tpu_custom_call.1} parent=35 // pred_check
          %p587 = pneg %p586
        $region46: #{tpu_custom_call.1} parent=35 // pred_check_branch
          %589 = sbr.rel (%p587) target = $region48
        $region47: #{tpu_custom_call.1} parent=35 // pred_region
          %v590 = vld [vmem:[#allocation2] sm:$0xff]
          %v591 = vld [vmem:[#allocation2 + $0x8] sm:$0xff]
          %v592 = vld [vmem:[#allocation2 + $0x10] sm:$0xff]
          %v593 = vld [vmem:[#allocation2 + $0x18] sm:$0xff]
          %v594 = vld [vmem:[#allocation2 + $0x20] sm:$0xff]
          %v595 = vld [vmem:[#allocation2 + $0x28] sm:$0xff]
          %v596 = vld [vmem:[#allocation2 + $0x30] sm:$0xff]
          %v597 = vld [vmem:[#allocation2 + $0x38] sm:$0xff]
          %v598 = vld [vmem:[#allocation2 + $0x40] sm:$0xff]
          %v599 = vld [vmem:[#allocation2 + $0x48] sm:$0xff]
          %v600 = vld [vmem:[#allocation2 + $0x50] sm:$0xff]
          %v601 = vld [vmem:[#allocation2 + $0x58] sm:$0xff]
          %v602 = vld [vmem:[#allocation2 + $0x60] sm:$0xff]
          %v603 = vld [vmem:[#allocation2 + $0x68] sm:$0xff]
          %v604 = vld [vmem:[#allocation2 + $0x70] sm:$0xff]
          %v605 = vld [vmem:[#allocation2 + $0x78] sm:$0xff]
          %v606 = vadd.f32 %v590, %v526
          %v607 = vadd.f32 %v591, %v528
          %v608 = vadd.f32 %v592, %v531
          %v609 = vadd.f32 %v593, %v533
          %v610 = vadd.f32 %v594, %v536
          %v611 = vadd.f32 %v595, %v538
          %v612 = vadd.f32 %v596, %v541
          %v613 = vadd.f32 %v597, %v543
          %v614 = vadd.f32 %v598, %v546
          %v615 = vadd.f32 %v599, %v548
          %v616 = vadd.f32 %v600, %v551
          %v617 = vadd.f32 %v601, %v553
          %v618 = vadd.f32 %v602, %v556
          %v619 = vadd.f32 %v603, %v558
          %v620 = vadd.f32 %v604, %v561
          %v621 = vadd.f32 %v605, %v563
          %vm622 = vcmask 523264
          %623 = vst.msk [vmem:[#allocation2] sm:$0xff] %vm622, %v606
          %624 = vst.msk [vmem:[#allocation2 + $0x8] sm:$0xff] %vm622, %v607
          %625 = vst.msk [vmem:[#allocation2 + $0x10] sm:$0xff] %vm622, %v608
          %626 = vst.msk [vmem:[#allocation2 + $0x18] sm:$0xff] %vm622, %v609
          %627 = vst.msk [vmem:[#allocation2 + $0x20] sm:$0xff] %vm622, %v610
          %628 = vst.msk [vmem:[#allocation2 + $0x28] sm:$0xff] %vm622, %v611
          %629 = vst.msk [vmem:[#allocation2 + $0x30] sm:$0xff] %vm622, %v612
          %630 = vst.msk [vmem:[#allocation2 + $0x38] sm:$0xff] %vm622, %v613
          %631 = vst.msk [vmem:[#allocation2 + $0x40] sm:$0xff] %vm622, %v614
          %632 = vst.msk [vmem:[#allocation2 + $0x48] sm:$0xff] %vm622, %v615
          %633 = vst.msk [vmem:[#allocation2 + $0x50] sm:$0xff] %vm622, %v616
          %634 = vst.msk [vmem:[#allocation2 + $0x58] sm:$0xff] %vm622, %v617
          %635 = vst.msk [vmem:[#allocation2 + $0x60] sm:$0xff] %vm622, %v618
          %636 = vst.msk [vmem:[#allocation2 + $0x68] sm:$0xff] %vm622, %v619
          %637 = vst.msk [vmem:[#allocation2 + $0x70] sm:$0xff] %vm622, %v620
          %638 = vst.msk [vmem:[#allocation2 + $0x78] sm:$0xff] %vm622, %v621
        $region48: #{tpu_custom_call.1} parent=35 // pred_fallthru
          _
        // Predicated region
        $region49: #{tpu_custom_call.1} parent=35 // pred_check
          %p639 = pneg %p565
        $region50: #{tpu_custom_call.1} parent=35 // pred_check_branch
          %641 = sbr.rel (%p639) target = $region52
        $region51: #{tpu_custom_call.1} parent=35 // pred_region
          %v642 = vld [vmem:[#allocation2] sm:$0xff]
          %v643 = vld [vmem:[#allocation2 + $0x8] sm:$0xff]
          %v644 = vld [vmem:[#allocation2 + $0x10] sm:$0xff]
          %v645 = vld [vmem:[#allocation2 + $0x18] sm:$0xff]
          %v646 = vld [vmem:[#allocation2 + $0x20] sm:$0xff]
          %v647 = vld [vmem:[#allocation2 + $0x28] sm:$0xff]
          %v648 = vld [vmem:[#allocation2 + $0x30] sm:$0xff]
          %v649 = vld [vmem:[#allocation2 + $0x38] sm:$0xff]
          %v650 = vld [vmem:[#allocation2 + $0x40] sm:$0xff]
          %v651 = vld [vmem:[#allocation2 + $0x48] sm:$0xff]
          %v652 = vld [vmem:[#allocation2 + $0x50] sm:$0xff]
          %v653 = vld [vmem:[#allocation2 + $0x58] sm:$0xff]
          %v654 = vld [vmem:[#allocation2 + $0x60] sm:$0xff]
          %v655 = vld [vmem:[#allocation2 + $0x68] sm:$0xff]
          %v656 = vld [vmem:[#allocation2 + $0x70] sm:$0xff]
          %v657 = vld [vmem:[#allocation2 + $0x78] sm:$0xff]
          %v658 = vld [vmem:[%s2] sm:$0xff]
          %v659 = vld [vmem:[%s2 + $0x8] sm:$0xff]
          %v660 = vld [vmem:[%s2 + $0x10] sm:$0xff]
          %v661 = vld [vmem:[%s2 + $0x18] sm:$0xff]
          %v662 = vld [vmem:[%s2 + $0x20] sm:$0xff]
          %v663 = vld [vmem:[%s2 + $0x28] sm:$0xff]
          %v664 = vld [vmem:[%s2 + $0x30] sm:$0xff]
          %v665 = vld [vmem:[%s2 + $0x38] sm:$0xff]
          %v666 = vld [vmem:[%s3] sm:$0x1]
          %v668 = vperm.slane %v666, 0
          %vm670 = vcmask 523264
          %v672 = vsel %vm670, %v642, 0
          %v675 = vsel %vm670, %v643, 0
          %v678 = vsel %vm670, %v644, 0
          %v681 = vsel %vm670, %v645, 0
          %v684 = vsel %vm670, %v646, 0
          %v687 = vsel %vm670, %v647, 0
          %v690 = vsel %vm670, %v648, 0
          %v693 = vsel %vm670, %v649, 0
          %v696 = vsel %vm670, %v650, 0
          %v699 = vsel %vm670, %v651, 0
          %v702 = vsel %vm670, %v652, 0
          %v705 = vsel %vm670, %v653, 0
          %v708 = vsel %vm670, %v654, 0
          %v711 = vsel %vm670, %v655, 0
          %v714 = vsel %vm670, %v656, 0
          %v717 = vsel %vm670, %v657, 0
          %719 = vmatpush.msra.mxu0 0.0
          %720 = vmatpush.msra.mxu0 0.0
          %721 = vmatpush.msra.mxu0 0.0
          %722 = vmatpush.msra.mxu0 0.0
          %723 = vmatpush.msra.mxu0 0.0
          %724 = vmatpush.msra.mxu0 0.0
          %725 = vmatpush.msra.mxu0 0.0
          %726 = vmatpush.msra.mxu0 0.0
          %727 = vmatpush.msra.mxu0 %v665
          %728 = vmatpush.msra.mxu0 %v664
          %729 = vmatpush.msra.mxu0 %v663
          %730 = vmatpush.msra.mxu0 %v662
          %731 = vmatpush.msra.mxu0 %v661
          %732 = vmatpush.msra.mxu0 %v660
          %733 = vmatpush.msra.mxu0 %v659
          %734 = vmatpush.msra.mxu0 %v658
          %735 = vmatmul.f32.gmra.mxu0 %v672
          %v736 = vpop.f32.mrf.mxu0
          %v737 = vadd.f32 %v668, %v736
          %738 = vmatmul.f32.gmra.mxu0 %v675
          %v739 = vpop.f32.mrf.mxu0
          %v740 = vadd.f32 %v668, %v739
          %741 = vmatmul.f32.gmra.mxu0 %v678
          %v742 = vpop.f32.mrf.mxu0
          %v743 = vadd.f32 %v668, %v742
          %744 = vmatmul.f32.gmra.mxu0 %v681
          %v745 = vpop.f32.mrf.mxu0
          %v746 = vadd.f32 %v668, %v745
          %747 = vmatmul.f32.gmra.mxu0 %v684
          %v748 = vpop.f32.mrf.mxu0
          %v749 = vadd.f32 %v668, %v748
          %750 = vmatmul.f32.gmra.mxu0 %v687
          %v751 = vpop.f32.mrf.mxu0
          %v752 = vadd.f32 %v668, %v751
          %753 = vmatmul.f32.gmra.mxu0 %v690
          %v754 = vpop.f32.mrf.mxu0
          %v755 = vadd.f32 %v668, %v754
          %756 = vmatmul.f32.gmra.mxu0 %v693
          %v757 = vpop.f32.mrf.mxu0
          %v758 = vadd.f32 %v668, %v757
          %759 = vmatmul.f32.gmra.mxu0 %v696
          %v760 = vpop.f32.mrf.mxu0
          %v761 = vadd.f32 %v668, %v760
          %762 = vmatmul.f32.gmra.mxu0 %v699
          %v763 = vpop.f32.mrf.mxu0
          %v764 = vadd.f32 %v668, %v763
          %765 = vmatmul.f32.gmra.mxu0 %v702
          %v766 = vpop.f32.mrf.mxu0
          %v767 = vadd.f32 %v668, %v766
          %768 = vmatmul.f32.gmra.mxu0 %v705
          %v769 = vpop.f32.mrf.mxu0
          %v770 = vadd.f32 %v668, %v769
          %771 = vmatmul.f32.gmra.mxu0 %v708
          %v772 = vpop.f32.mrf.mxu0
          %v773 = vadd.f32 %v668, %v772
          %774 = vmatmul.f32.gmra.mxu0 %v711
          %v775 = vpop.f32.mrf.mxu0
          %v776 = vadd.f32 %v668, %v775
          %777 = vmatmul.f32.gmra.mxu0 %v714
          %v778 = vpop.f32.mrf.mxu0
          %v779 = vadd.f32 %v668, %v778
          %780 = vmatmul.f32.gmra.mxu0 %v717
          %v781 = vpop.f32.mrf.mxu0
          %v782 = vadd.f32 %v668, %v781
          %783 = vdwg.mxu0
          %v784 = vmax.f32 %v737, 0.0
          %v785 = vmax.f32 %v740, 0.0
          %v786 = vmax.f32 %v743, 0.0
          %v787 = vmax.f32 %v746, 0.0
          %v788 = vmax.f32 %v749, 0.0
          %v789 = vmax.f32 %v752, 0.0
          %v790 = vmax.f32 %v755, 0.0
          %v791 = vmax.f32 %v758, 0.0
          %v792 = vmax.f32 %v761, 0.0
          %v793 = vmax.f32 %v764, 0.0
          %v794 = vmax.f32 %v767, 0.0
          %v795 = vmax.f32 %v770, 0.0
          %v796 = vmax.f32 %v773, 0.0
          %v797 = vmax.f32 %v776, 0.0
          %v798 = vmax.f32 %v779, 0.0
          %v799 = vmax.f32 %v782, 0.0
          %v800 = vpack.c.bf16 %v784, %v784
          %v801 = vpack.c.bf16 %v785, %v785
          %v802 = vpack.c.bf16 %v786, %v786
          %v803 = vpack.c.bf16 %v787, %v787
          %v804 = vpack.c.bf16 %v788, %v788
          %v805 = vpack.c.bf16 %v789, %v789
          %v806 = vpack.c.bf16 %v790, %v790
          %v807 = vpack.c.bf16 %v791, %v791
          %v808 = vpack.c.bf16 %v792, %v792
          %v809 = vpack.c.bf16 %v793, %v793
          %v810 = vpack.c.bf16 %v794, %v794
          %v811 = vpack.c.bf16 %v795, %v795
          %v812 = vpack.c.bf16 %v796, %v796
          %v813 = vpack.c.bf16 %v797, %v797
          %v814 = vpack.c.bf16 %v798, %v798
          %v815 = vpack.c.bf16 %v799, %v799
          %816 = vst [vmem:[%s234] sm:$0xf] %v800
          %817 = vst [vmem:[%s234 + $0x4] sm:$0xf] %v801
          %818 = vst [vmem:[%s234 + $0x8] sm:$0xf] %v802
          %819 = vst [vmem:[%s234 + $0xc] sm:$0xf] %v803
          %820 = vst [vmem:[%s234 + $0x10] sm:$0xf] %v804
          %821 = vst [vmem:[%s234 + $0x14] sm:$0xf] %v805
          %822 = vst [vmem:[%s234 + $0x18] sm:$0xf] %v806
          %823 = vst [vmem:[%s234 + $0x1c] sm:$0xf] %v807
          %824 = vst [vmem:[%s234 + $0x20] sm:$0xf] %v808
          %825 = vst [vmem:[%s234 + $0x24] sm:$0xf] %v809
          %826 = vst [vmem:[%s234 + $0x28] sm:$0xf] %v810
          %827 = vst [vmem:[%s234 + $0x2c] sm:$0xf] %v811
          %828 = vst [vmem:[%s234 + $0x30] sm:$0xf] %v812
          %829 = vst [vmem:[%s234 + $0x34] sm:$0xf] %v813
          %830 = vst [vmem:[%s234 + $0x38] sm:$0xf] %v814
          %831 = vst [vmem:[%s234 + $0x3c] sm:$0xf] %v815
        $region52: #{tpu_custom_call.1} parent=35 // pred_fallthru
          _
        %s832 = sand.u32 %s132, 1
        %s833 = scalar_lea.sflag [#allocation5], %s832
        %s834 = sand.u32 %s132, 1
        %s835 = smul.addr %s834, 64
        %s836 = scalar_lea.vmem [#allocation6], %s835
        // Predicated region
        $region53: #{tpu_custom_call.1} parent=35 // pred_check
          %p837 = pneg %p142
        $region54: #{tpu_custom_call.1} parent=35 // pred_check_branch
          %839 = sbr.rel (%p837) target = $region56
        $region55: #{tpu_custom_call.1} parent=35 // pred_region
          %s840 = smul.u32 16, %s25
          %842 = vsyncadd %s833, 0
          %s843 = smul.addr %s840, 4
          %s844 = scalar_lea.hbm %s4, %s843
          %s845 = sshll.u32 %s836, 4
          %s846 = int_to_ptr.vmem [resolvable:$true] %s845
          %s847 = sshll.u32 %s844, 4
          %s848 = int_to_ptr.hbm [resolvable:$true] %s847
          %853 = dma.vmem_to_hbm [thread:$0]  %s846, 1024, %s848, %s833, 64, 64, 4
        $region56: #{tpu_custom_call.1} parent=35 // pred_fallthru
          _
      $region36: #{tpu_custom_call.1} parent=5 // pred_fallthru
        _
      %p854 = scmp.le.s32.totalorder 2, %s16
      // Predicated region
      $region57: #{tpu_custom_call.1} parent=5 // pred_check
        %p855 = pneg %p854
      $region58: #{tpu_custom_call.1} parent=5 // pred_check_branch
        %857 = sbr.rel (%p855) target = $region60
      $region59: #{tpu_custom_call.1} parent=5 // pred_region
        %s858 = ssub.s32 %s16, 2
        // Predicated region
        $region61: #{tpu_custom_call.1} parent=59 // pred_check
          %p859 = pneg %p148
        $region62: #{tpu_custom_call.1} parent=59 // pred_check_branch
          %861 = sbr.rel (%p859) target = $region64
        $region63: #{tpu_custom_call.1} parent=59 // pred_region
          %s862 = sand.u32 %s133, 1
          %s863 = scalar_lea.sflag [#allocation5], %s862
          %s864 = sand.u32 %s133, 1
          %s865 = smul.addr %s864, 64
          %s866 = scalar_lea.vmem [#allocation6], %s865
          %868 = dma.done %s863, 1024
        $region64: #{tpu_custom_call.1} parent=59 // pred_fallthru
          _
      $region60: #{tpu_custom_call.1} parent=5 // pred_fallthru
        _
    $region6: #{tpu_custom_call.1} parent=1 // loop_footer
      %s20 = sadd.s32 1, %s16
    $region7: #{tpu_custom_call.1} parent=1 // loop_footer_branch
      %15 = sbr.rel target = $region3
    $region8: #{tpu_custom_call.1} parent=1 // loop_exit
      _
    %869 = vsyncpa [#allocation4], 1
    %s870 = scalar_lea.sflag [#allocation4], 1
    %871 = vsyncpa %s870, 1
    %872 = vsyncpa [#allocation5], 1
    %s873 = scalar_lea.sflag [#allocation5], 1
    %874 = vsyncpa %s873, 1

</llo_original>
